<compile_context>
chip_gen: v5e
topology: v5e:2x2
jax: 0.10.0
libtpu: 0.0.40
codegen_flags: <defaults>
</compile_context>

<pallas_src>
import functools

import jax
import jax.numpy as jnp
from jax.experimental import pallas as pl
from jax.experimental.pallas import tpu as pltpu


def _round_up(x, m):
    return ((x + m - 1) // m) * m


def _deepset_kernel(x_ref, w_in_ref, w_hid_ref, w_out_ref, b_ref, o_ref, *,
                    set_size):
    # x_ref    : (TB*N, D_in)   bf16  flattened batch-tile of set elements
    # w_in_ref : (D_in, H)      bf16  encoder layer 1 weight
    # w_hid_ref: (6, H, H)      bf16  enc2, enc3, enc4, dec1, dec2, dec3
    # w_out_ref: (H, OUT_PAD)   bf16  decoder layer 4 weight, lane-padded
    # b_ref    : (8, BW)        f32   all 8 biases (last one zero-padded)
    # o_ref    : (TB, OUT_PAD)  f32   lane-dense per-tile output block
    h_dim = w_hid_ref.shape[-1]
    out_pad = w_out_ref.shape[-1]
    rows = x_ref.shape[0]
    tb = rows // set_size
    cdt = jnp.bfloat16  # MXU input dtype; accumulation stays f32.

    # ---- encoder: Linear+ReLU x3, Linear (on the whole (TB*N, D) slab) ---
    h = jnp.dot(x_ref[...], w_in_ref[...], preferred_element_type=jnp.float32)
    h = jnp.maximum(h + b_ref[0:1, :h_dim], 0.0)
    for l in range(3):  # encoder layers 2, 3, 4
        h = jnp.dot(h.astype(cdt), w_hid_ref[l],
                    preferred_element_type=jnp.float32)
        h = h + b_ref[1 + l:2 + l, :h_dim]
        if l < 2:  # no ReLU after encoder layer 4
            h = jnp.maximum(h, 0.0)

    # ---- pool == 'max' over the set axis (sublane reduction, H on lanes) -
    pooled = jnp.max(h.reshape(tb, set_size, h_dim), axis=1)  # (TB, H)

    # ---- decoder: Linear+ReLU x3, Linear into lane-padded output ---------
    d = pooled
    for l in range(3):  # decoder layers 1, 2, 3
        d = jnp.dot(d.astype(cdt), w_hid_ref[3 + l],
                    preferred_element_type=jnp.float32)
        d = jnp.maximum(d + b_ref[4 + l:5 + l, :h_dim], 0.0)
    d = jnp.dot(d.astype(cdt), w_out_ref[...],
                preferred_element_type=jnp.float32)
    d = d + b_ref[7:8, :out_pad]

    o_ref[...] = d.astype(o_ref.dtype)  # full-block, unmasked, lane-dense


def init_deepset_params(key, dim_input, dim_hidden=128, dim_output=2):
    """Deterministic PyTorch-style (uniform +-1/sqrt(fan_in)) init."""
    dims_enc = [(dim_input, dim_hidden), (dim_hidden, dim_hidden),
                (dim_hidden, dim_hidden), (dim_hidden, dim_hidden)]
    dims_dec = [(dim_hidden, dim_hidden), (dim_hidden, dim_hidden),
                (dim_hidden, dim_hidden), (dim_hidden, dim_output)]
    params = []
    for (fan_in, fan_out) in dims_enc + dims_dec:
        key, kw, kb = jax.random.split(key, 3)
        bound = 1.0 / jnp.sqrt(fan_in)
        w = jax.random.uniform(kw, (fan_in, fan_out), jnp.float32, -bound, bound)
        b = jax.random.uniform(kb, (1, fan_out), jnp.float32, -bound, bound)
        params.append((w, b))
    return params  # list of 8 (W, b) pairs: 4 encoder, 4 decoder


def deepset_forward(x, params, *, tile_batch=256):
    B, N, D_in = x.shape
    H = params[0][0].shape[1]
    D_out = params[7][0].shape[1]
    out_pad = _round_up(D_out, 128)   # lane-dense output width
    bw = max(H, out_pad)              # common padded bias width

    # ---- consolidate parameters; pre-cast matmul weights to bf16 ---------
    w_in = params[0][0].astype(jnp.bfloat16)                       # (D_in, H)
    w_hid = jnp.stack(
        [params[i][0] for i in (1, 2, 3, 4, 5, 6)]).astype(jnp.bfloat16)  # (6,H,H)
    w_out = (jnp.zeros((H, out_pad), jnp.float32)
             .at[:, :D_out].set(params[7][0])).astype(jnp.bfloat16)
    biases = []
    for i in range(8):
        b = params[i][1].reshape(-1)
        biases.append(jnp.zeros((bw,), jnp.float32).at[:b.shape[0]].set(b))
    b_all = jnp.stack(biases, axis=0)                              # (8, bw) f32

    # ---- choose the batch tile (TB) ---------------------------------------
    # TB is a multiple of 8.  For small/medium batches split into >=2 grid
    # steps so the "parallel" axis can shard across v7x's two TensorCores
    # (harmless on v5e/v6e).  Large batches use tile_batch to amortize the
    # per-step pipeline overhead; ragged last tiles are zero-padded.
    if B <= tile_batch:
        tb = max(8, min(tile_batch, _round_up(pl.cdiv(B, 2), 8)))
    else:
        tb = tile_batch
    b_pad = _round_up(B, tb)

    x = x.astype(jnp.bfloat16)        # pre-cast X; MXU takes bf16 directly
    if b_pad != B:
        x = jnp.pad(x, ((0, b_pad - B), (0, 0), (0, 0)))
    x_flat = x.reshape(b_pad * N, D_in)   # flatten (batch, set) rows
    rows = tb * N

    kernel = functools.partial(_deepset_kernel, set_size=N)

    out = pl.pallas_call(
        kernel,
        out_shape=jax.ShapeDtypeStruct((b_pad, out_pad), jnp.float32),
        grid_spec=pltpu.PrefetchScalarGridSpec(
            num_scalar_prefetch=0,
            grid=(b_pad // tb,),
            in_specs=[
                pl.BlockSpec((rows, D_in), lambda i: (i, 0)),     # X tile (bf16)
                pl.BlockSpec((D_in, H), lambda i: (0, 0)),        # w_in (bf16)
                pl.BlockSpec((6, H, H), lambda i: (0, 0, 0)),     # hidden Ws (bf16)
                pl.BlockSpec((H, out_pad), lambda i: (0, 0)),     # w_out (bf16, padded)
                pl.BlockSpec((8, bw), lambda i: (0, 0)),          # biases (f32)
            ],
            out_specs=pl.BlockSpec((tb, out_pad), lambda i: (i, 0)),
        ),
        compiler_params=pltpu.CompilerParams(
            dimension_semantics=("parallel",),   # per-tile output -> safe
        ),
    )(x_flat, w_in, w_hid, w_out, b_all)

    return out[:B, :D_out]


def deepset_reference(x, params):
    """Plain-JAX reference replicating the PyTorch forward (pool='max'),
    using the same bf16-input / f32-accumulate matmul numerics as the kernel."""
    def mm(a, w):
        return jnp.dot(a.astype(jnp.bfloat16), w.astype(jnp.bfloat16),
                       preferred_element_type=jnp.float32)

    h = x
    for i, (w, b) in enumerate(params[:4]):
        h = mm(h, w) + b.reshape(-1)
        if i < 3:
            h = jnp.maximum(h, 0.0)
    h = jnp.max(h, axis=1)
    for i, (w, b) in enumerate(params[4:]):
        h = mm(h, w) + b.reshape(-1)
        if i < 3:
            h = jnp.maximum(h, 0.0)
    return h


if __name__ == "__main__":
    B, N, D_in, H, D_out = 2, 8, 16, 128, 2

    key = jax.random.PRNGKey(0)
    key, kx = jax.random.split(key)
    x = jax.random.normal(kx, (B, N, D_in), jnp.float32)

    params = init_deepset_params(key, D_in, dim_hidden=H, dim_output=D_out)

    # --- small-batch test (single grid step) -------------------------------
    out = deepset_forward(x, params)
    out = jax.block_until_ready(out)
    ref = deepset_reference(x, params)
    assert out.shape == (B, D_out)
    assert jnp.allclose(out, ref, atol=1e-4, rtol=1e-4), (out, ref)

    # --- ragged multi-tile test (exercises padding + 2-step parallel grid) -
    B2 = 37
    key, kx2 = jax.random.split(key)
    x2 = jax.random.normal(kx2, (B2, N, D_in), jnp.float32)
    out2 = jax.block_until_ready(deepset_forward(x2, params))
    ref2 = deepset_reference(x2, params)
    assert out2.shape == (B2, D_out)
    assert jnp.allclose(out2, ref2, atol=1e-3, rtol=1e-3), (out2, ref2)

    print("KERNEL_OK")
</pallas_src>

<mosaic_0001>
module attributes {stable_mosaic.version = 11 : i64} {
  func.func @_deepset_kernel(%arg0: i32, %arg1: memref<64x16xbf16, #tpu.memory_space<vmem>>, %arg2: memref<16x128xbf16, #tpu.memory_space<vmem>>, %arg3: memref<6x128x128xbf16, #tpu.memory_space<vmem>>, %arg4: memref<128x128xbf16, #tpu.memory_space<vmem>>, %arg5: memref<8x128xf32, #tpu.memory_space<vmem>>, %arg6: memref<8x128xf32, #tpu.memory_space<vmem>>) attributes {dimension_semantics = [#tpu.dimension_semantics<parallel>], iteration_bounds = array<i64: 1>, scalar_prefetch = 0 : i64, scratch_operands = 0 : i64, tpu.core_type = #tpu.core_type<tc>, window_params = [{transform_indices = @transform_0, window_bounds = array<i64: 64, 16>}, {pipeline_mode = #tpu.pipeline_mode<synchronous>, transform_indices = @transform_1, window_bounds = array<i64: 16, 128>}, {pipeline_mode = #tpu.pipeline_mode<synchronous>, transform_indices = @transform_2, window_bounds = array<i64: 6, 128, 128>}, {pipeline_mode = #tpu.pipeline_mode<synchronous>, transform_indices = @transform_3, window_bounds = array<i64: 128, 128>}, {pipeline_mode = #tpu.pipeline_mode<synchronous>, transform_indices = @transform_4, window_bounds = array<i64: 8, 128>}, {transform_indices = @transform_5, window_bounds = array<i64: 8, 128>}]} {
    %c0 = arith.constant 0 : index
    %c0_0 = arith.constant 0 : index
    %0 = vector.load %arg1[%c0, %c0_0] : memref<64x16xbf16, #tpu.memory_space<vmem>>, vector<64x16xbf16>
    %c0_1 = arith.constant 0 : index
    %c0_2 = arith.constant 0 : index
    %1 = vector.load %arg2[%c0_1, %c0_2] : memref<16x128xbf16, #tpu.memory_space<vmem>>, vector<16x128xbf16>
    %cst = arith.constant dense<0.000000e+00> : vector<64x128xf32>
    %2 = tpu.matmul %0, %1, %cst {dimension_numbers = #tpu.dot_dimension_numbers<[1], [0], [0], [1], [0, 0, 1, 1], [], []>} : vector<64x16xbf16>, vector<16x128xbf16>, vector<64x128xf32> -> vector<64x128xf32>
    %c0_3 = arith.constant 0 : index
    %c0_4 = arith.constant 0 : index
    %3 = vector.load %arg5[%c0_3, %c0_4] : memref<8x128xf32, #tpu.memory_space<vmem>>, vector<1x128xf32>
    %4 = vector.broadcast %3 : vector<1x128xf32> to vector<64x128xf32>
    %5 = arith.addf %2, %4 : vector<64x128xf32>
    %cst_5 = arith.constant 0.000000e+00 : f32
    %6 = vector.broadcast %cst_5 : f32 to vector<64x128xf32>
    %7 = arith.maximumf %5, %6 : vector<64x128xf32>
    %8 = arith.truncf %7 : vector<64x128xf32> to vector<64x128xbf16>
    %c0_6 = arith.constant 0 : index
    %c0_7 = arith.constant 0 : index
    %c0_8 = arith.constant 0 : index
    %9 = vector.load %arg3[%c0_6, %c0_7, %c0_8] : memref<6x128x128xbf16, #tpu.memory_space<vmem>>, vector<1x128x128xbf16>
    %10 = vector.shape_cast %9 : vector<1x128x128xbf16> to vector<128x128xbf16>
    %cst_9 = arith.constant dense<0.000000e+00> : vector<64x128xf32>
    %11 = tpu.matmul %8, %10, %cst_9 {dimension_numbers = #tpu.dot_dimension_numbers<[1], [0], [0], [1], [0, 0, 1, 1], [], []>} : vector<64x128xbf16>, vector<128x128xbf16>, vector<64x128xf32> -> vector<64x128xf32>
    %c1 = arith.constant 1 : index
    %c0_10 = arith.constant 0 : index
    %12 = vector.load %arg5[%c1, %c0_10] : memref<8x128xf32, #tpu.memory_space<vmem>>, vector<1x128xf32>
    %13 = vector.broadcast %12 : vector<1x128xf32> to vector<64x128xf32>
    %14 = arith.addf %11, %13 : vector<64x128xf32>
    %cst_11 = arith.constant 0.000000e+00 : f32
    %15 = vector.broadcast %cst_11 : f32 to vector<64x128xf32>
    %16 = arith.maximumf %14, %15 : vector<64x128xf32>
    %17 = arith.truncf %16 : vector<64x128xf32> to vector<64x128xbf16>
    %c1_12 = arith.constant 1 : index
    %c0_13 = arith.constant 0 : index
    %c0_14 = arith.constant 0 : index
    %18 = vector.load %arg3[%c1_12, %c0_13, %c0_14] : memref<6x128x128xbf16, #tpu.memory_space<vmem>>, vector<1x128x128xbf16>
    %19 = vector.shape_cast %18 : vector<1x128x128xbf16> to vector<128x128xbf16>
    %cst_15 = arith.constant dense<0.000000e+00> : vector<64x128xf32>
    %20 = tpu.matmul %17, %19, %cst_15 {dimension_numbers = #tpu.dot_dimension_numbers<[1], [0], [0], [1], [0, 0, 1, 1], [], []>} : vector<64x128xbf16>, vector<128x128xbf16>, vector<64x128xf32> -> vector<64x128xf32>
    %c2 = arith.constant 2 : index
    %c0_16 = arith.constant 0 : index
    %21 = vector.load %arg5[%c2, %c0_16] : memref<8x128xf32, #tpu.memory_space<vmem>>, vector<1x128xf32>
    %22 = vector.broadcast %21 : vector<1x128xf32> to vector<64x128xf32>
    %23 = arith.addf %20, %22 : vector<64x128xf32>
    %cst_17 = arith.constant 0.000000e+00 : f32
    %24 = vector.broadcast %cst_17 : f32 to vector<64x128xf32>
    %25 = arith.maximumf %23, %24 : vector<64x128xf32>
    %26 = arith.truncf %25 : vector<64x128xf32> to vector<64x128xbf16>
    %c2_18 = arith.constant 2 : index
    %c0_19 = arith.constant 0 : index
    %c0_20 = arith.constant 0 : index
    %27 = vector.load %arg3[%c2_18, %c0_19, %c0_20] : memref<6x128x128xbf16, #tpu.memory_space<vmem>>, vector<1x128x128xbf16>
    %28 = vector.shape_cast %27 : vector<1x128x128xbf16> to vector<128x128xbf16>
    %cst_21 = arith.constant dense<0.000000e+00> : vector<64x128xf32>
    %29 = tpu.matmul %26, %28, %cst_21 {dimension_numbers = #tpu.dot_dimension_numbers<[1], [0], [0], [1], [0, 0, 1, 1], [], []>} : vector<64x128xbf16>, vector<128x128xbf16>, vector<64x128xf32> -> vector<64x128xf32>
    %c3 = arith.constant 3 : index
    %c0_22 = arith.constant 0 : index
    %30 = vector.load %arg5[%c3, %c0_22] : memref<8x128xf32, #tpu.memory_space<vmem>>, vector<1x128xf32>
    %31 = vector.broadcast %30 : vector<1x128xf32> to vector<64x128xf32>
    %32 = arith.addf %29, %31 : vector<64x128xf32>
    %33 = vector.shape_cast %32 : vector<64x128xf32> to vector<8x8x128xf32>
    %cst_23 = arith.constant dense<0xFF800000> : vector<8x128xf32>
    %34 = vector.multi_reduction <maximumf>, %33, %cst_23 [1] : vector<8x8x128xf32> to vector<8x128xf32>
    %35 = arith.truncf %34 : vector<8x128xf32> to vector<8x128xbf16>
    %c3_24 = arith.constant 3 : index
    %c0_25 = arith.constant 0 : index
    %c0_26 = arith.constant 0 : index
    %36 = vector.load %arg3[%c3_24, %c0_25, %c0_26] : memref<6x128x128xbf16, #tpu.memory_space<vmem>>, vector<1x128x128xbf16>
    %37 = vector.shape_cast %36 : vector<1x128x128xbf16> to vector<128x128xbf16>
    %cst_27 = arith.constant dense<0.000000e+00> : vector<8x128xf32>
    %38 = tpu.matmul %35, %37, %cst_27 {dimension_numbers = #tpu.dot_dimension_numbers<[1], [0], [0], [1], [0, 0, 1, 1], [], []>} : vector<8x128xbf16>, vector<128x128xbf16>, vector<8x128xf32> -> vector<8x128xf32>
    %c4 = arith.constant 4 : index
    %c0_28 = arith.constant 0 : index
    %39 = vector.load %arg5[%c4, %c0_28] : memref<8x128xf32, #tpu.memory_space<vmem>>, vector<1x128xf32>
    %40 = vector.broadcast %39 : vector<1x128xf32> to vector<8x128xf32>
    %41 = arith.addf %38, %40 : vector<8x128xf32>
    %cst_29 = arith.constant 0.000000e+00 : f32
    %42 = vector.broadcast %cst_29 : f32 to vector<8x128xf32>
    %43 = arith.maximumf %41, %42 : vector<8x128xf32>
    %44 = arith.truncf %43 : vector<8x128xf32> to vector<8x128xbf16>
    %c4_30 = arith.constant 4 : index
    %c0_31 = arith.constant 0 : index
    %c0_32 = arith.constant 0 : index
    %45 = vector.load %arg3[%c4_30, %c0_31, %c0_32] : memref<6x128x128xbf16, #tpu.memory_space<vmem>>, vector<1x128x128xbf16>
    %46 = vector.shape_cast %45 : vector<1x128x128xbf16> to vector<128x128xbf16>
    %cst_33 = arith.constant dense<0.000000e+00> : vector<8x128xf32>
    %47 = tpu.matmul %44, %46, %cst_33 {dimension_numbers = #tpu.dot_dimension_numbers<[1], [0], [0], [1], [0, 0, 1, 1], [], []>} : vector<8x128xbf16>, vector<128x128xbf16>, vector<8x128xf32> -> vector<8x128xf32>
    %c5 = arith.constant 5 : index
    %c0_34 = arith.constant 0 : index
    %48 = vector.load %arg5[%c5, %c0_34] : memref<8x128xf32, #tpu.memory_space<vmem>>, vector<1x128xf32>
    %49 = vector.broadcast %48 : vector<1x128xf32> to vector<8x128xf32>
    %50 = arith.addf %47, %49 : vector<8x128xf32>
    %cst_35 = arith.constant 0.000000e+00 : f32
    %51 = vector.broadcast %cst_35 : f32 to vector<8x128xf32>
    %52 = arith.maximumf %50, %51 : vector<8x128xf32>
    %53 = arith.truncf %52 : vector<8x128xf32> to vector<8x128xbf16>
    %c5_36 = arith.constant 5 : index
    %c0_37 = arith.constant 0 : index
    %c0_38 = arith.constant 0 : index
    %54 = vector.load %arg3[%c5_36, %c0_37, %c0_38] : memref<6x128x128xbf16, #tpu.memory_space<vmem>>, vector<1x128x128xbf16>
    %55 = vector.shape_cast %54 : vector<1x128x128xbf16> to vector<128x128xbf16>
    %cst_39 = arith.constant dense<0.000000e+00> : vector<8x128xf32>
    %56 = tpu.matmul %53, %55, %cst_39 {dimension_numbers = #tpu.dot_dimension_numbers<[1], [0], [0], [1], [0, 0, 1, 1], [], []>} : vector<8x128xbf16>, vector<128x128xbf16>, vector<8x128xf32> -> vector<8x128xf32>
    %c6 = arith.constant 6 : index
    %c0_40 = arith.constant 0 : index
    %57 = vector.load %arg5[%c6, %c0_40] : memref<8x128xf32, #tpu.memory_space<vmem>>, vector<1x128xf32>
    %58 = vector.broadcast %57 : vector<1x128xf32> to vector<8x128xf32>
    %59 = arith.addf %56, %58 : vector<8x128xf32>
    %cst_41 = arith.constant 0.000000e+00 : f32
    %60 = vector.broadcast %cst_41 : f32 to vector<8x128xf32>
    %61 = arith.maximumf %59, %60 : vector<8x128xf32>
    %62 = arith.truncf %61 : vector<8x128xf32> to vector<8x128xbf16>
    %c0_42 = arith.constant 0 : index
    %c0_43 = arith.constant 0 : index
    %63 = vector.load %arg4[%c0_42, %c0_43] : memref<128x128xbf16, #tpu.memory_space<vmem>>, vector<128x128xbf16>
    %cst_44 = arith.constant dense<0.000000e+00> : vector<8x128xf32>
    %64 = tpu.matmul %62, %63, %cst_44 {dimension_numbers = #tpu.dot_dimension_numbers<[1], [0], [0], [1], [0, 0, 1, 1], [], []>} : vector<8x128xbf16>, vector<128x128xbf16>, vector<8x128xf32> -> vector<8x128xf32>
    %c7 = arith.constant 7 : index
    %c0_45 = arith.constant 0 : index
    %65 = vector.load %arg5[%c7, %c0_45] : memref<8x128xf32, #tpu.memory_space<vmem>>, vector<1x128xf32>
    %66 = vector.broadcast %65 : vector<1x128xf32> to vector<8x128xf32>
    %67 = arith.addf %64, %66 : vector<8x128xf32>
    %c0_46 = arith.constant 0 : index
    %c0_47 = arith.constant 0 : index
    %68 = vector.load %arg6[%c0_46, %c0_47] : memref<8x128xf32, #tpu.memory_space<vmem>>, vector<8x128xf32>
    tpu.vector_store %arg6[%c0_46, %c0_47], %67 {strides = array<i32>} : memref<8x128xf32, #tpu.memory_space<vmem>>, vector<8x128xf32>,
    return
  }
  func.func @transform_0(%arg0: i32) -> (i32, i32) {
    %c0_i32 = arith.constant 0 : i32
    %c0_i32_0 = arith.constant 0 : i32
    return %arg0, %c0_i32 : i32, i32
  }
  func.func @transform_1(%arg0: i32) -> (i32, i32) {
    %c0_i32 = arith.constant 0 : i32
    %c0_i32_0 = arith.constant 0 : i32
    %c0_i32_1 = arith.constant 0 : i32
    return %c0_i32, %c0_i32_0 : i32, i32
  }
  func.func @transform_2(%arg0: i32) -> (i32, i32, i32) {
    %c0_i32 = arith.constant 0 : i32
    %c0_i32_0 = arith.constant 0 : i32
    %c0_i32_1 = arith.constant 0 : i32
    %c0_i32_2 = arith.constant 0 : i32
    return %c0_i32, %c0_i32_0, %c0_i32_1 : i32, i32, i32
  }
  func.func @transform_3(%arg0: i32) -> (i32, i32) {
    %c0_i32 = arith.constant 0 : i32
    %c0_i32_0 = arith.constant 0 : i32
    %c0_i32_1 = arith.constant 0 : i32
    return %c0_i32, %c0_i32_0 : i32, i32
  }
  func.func @transform_4(%arg0: i32) -> (i32, i32) {
    %c0_i32 = arith.constant 0 : i32
    %c0_i32_0 = arith.constant 0 : i32
    %c0_i32_1 = arith.constant 0 : i32
    return %c0_i32, %c0_i32_0 : i32, i32
  }
  func.func @transform_5(%arg0: i32) -> (i32, i32) {
    %c0_i32 = arith.constant 0 : i32
    %c0_i32_0 = arith.constant 0 : i32
    return %arg0, %c0_i32 : i32, i32
  }
}

</mosaic_0001>

<llo_original>
// kernel: tpu_custom_call.1
$region0: #{tpu_custom_call.1}
  #allocation0 [shape = 'u32[]', space=smem, size = 0x4, offset = 0x4, fixed_abs, tag = 'smem constant byte address 0x4 - core index']
  #allocation1 [shape = 'u32[72,128]{1,0:T(1,128)}', space=vmem, size = 0x9000, scoped, tag = 'internal scratch']
  %s0 = inlined_call_operand.vmem [shape: bf16[64,16], index: 0, kind: input, shape index: {}]
  %s1 = inlined_call_operand.vmem [shape: bf16[16,128], index: 1, kind: input, shape index: {}]
  %s2 = inlined_call_operand.hbm [shape: bf16[6,128,128], index: 2, kind: input, shape index: {}]
  %s3 = inlined_call_operand.hbm [shape: bf16[128,128], index: 3, kind: input, shape index: {}]
  %s4 = inlined_call_operand.vmem [shape: f32[8,128], index: 4, kind: input, shape index: {}]
  %s5 = inlined_call_operand.hbm [shape: f32[8,128], index: 5, kind: output, shape index: {}]
  %s6 = sld [smem:[#allocation0]]
  $region38: #{tpu_custom_call.1} parent=0
    _
  %s8 = ssub.s32 1, %s6
  %s9 = scalar_select 0, %s8, %s6
  $region1: #{tpu_custom_call.1} parent=0
    #allocation2 [shape = 'u8[196608]{0}', space=vmem, size = 0x30000, scoped, tag = 'input window, operand 2, single buffered']
    #allocation3 [shape = 's32[1]{0}', space=sflag, size = 0x4, scoped, tag = 'scoped memory for tpu_custom_call.1']
    #allocation4 [shape = 's32[1]{0}', space=sflag, size = 0x4, scoped, tag = 'scoped memory for tpu_custom_call.1']
    #allocation5 [shape = 'u8[32768]{0}', space=vmem, size = 0x8000, scoped, tag = 'input window, operand 3, single buffered']
    #allocation6 [shape = 's32[1]{0}', space=sflag, size = 0x4, scoped, tag = 'scoped memory for tpu_custom_call.1']
    #allocation7 [shape = 'u8[4096]{0}', space=vmem, size = 0x1000, scoped, tag = 'output window, operand 0, single buffered']
    %10 = vsyncpa [#allocation3], 0
    %11 = vsyncpa [#allocation6], 0
    %12 = vsyncpa [#allocation4], 0
    // Predicated region
    $region2: #{tpu_custom_call.1} parent=1 // pred_check
      _
    $region3: #{tpu_custom_call.1} parent=1 // pred_check_branch
      %14 = sbr.rel (0) target = $region5
    $region4: #{tpu_custom_call.1} parent=1 // pred_region
      _
    $region5: #{tpu_custom_call.1} parent=1 // pred_fallthru
      _
    // Predicated region
    $region6: #{tpu_custom_call.1} parent=1 // pred_check
      _
    $region7: #{tpu_custom_call.1} parent=1 // pred_check_branch
      %16 = sbr.rel (0) target = $region9
    $region8: #{tpu_custom_call.1} parent=1 // pred_region
      _
    $region9: #{tpu_custom_call.1} parent=1 // pred_fallthru
      _
    // Predicated region
    $region10: #{tpu_custom_call.1} parent=1 // pred_check
      _
    $region11: #{tpu_custom_call.1} parent=1 // pred_check_branch
      %18 = sbr.rel (0) target = $region13
    $region12: #{tpu_custom_call.1} parent=1 // pred_region
      %20 = vsyncadd [#allocation3], 0
      %s21 = sshll.u32 %s2, 4
      %s22 = int_to_ptr.hbm [resolvable:$true] %s21
      %s23 = sshll.u32 [#allocation2], 4
      %s24 = int_to_ptr.vmem [resolvable:$true] %s23
      %29 = dma.hbm_to_vmem [thread:$0]  %s22, 6144, %s24, [#allocation3], 64, 64, 4
    $region13: #{tpu_custom_call.1} parent=1 // pred_fallthru
      _
    // Predicated region
    $region14: #{tpu_custom_call.1} parent=1 // pred_check
      _
    $region15: #{tpu_custom_call.1} parent=1 // pred_check_branch
      %31 = sbr.rel (0) target = $region17
    $region16: #{tpu_custom_call.1} parent=1 // pred_region
      %33 = vsyncadd [#allocation6], 0
      %s34 = sshll.u32 %s3, 4
      %s35 = int_to_ptr.hbm [resolvable:$true] %s34
      %s36 = sshll.u32 [#allocation5], 4
      %s37 = int_to_ptr.vmem [resolvable:$true] %s36
      %42 = dma.hbm_to_vmem [thread:$0]  %s35, 1024, %s37, [#allocation6], 64, 64, 4
    $region17: #{tpu_custom_call.1} parent=1 // pred_fallthru
      _
    // Predicated region
    $region18: #{tpu_custom_call.1} parent=1 // pred_check
      _
    $region19: #{tpu_custom_call.1} parent=1 // pred_check_branch
      %44 = sbr.rel (0) target = $region21
    $region20: #{tpu_custom_call.1} parent=1 // pred_region
      _
    $region21: #{tpu_custom_call.1} parent=1 // pred_fallthru
      _
    // Predicated region
    $region22: #{tpu_custom_call.1} parent=1 // pred_check
      _
    $region23: #{tpu_custom_call.1} parent=1 // pred_check_branch
      %46 = sbr.rel (0) target = $region25
    $region24: #{tpu_custom_call.1} parent=1 // pred_region
      %48 = dma.done [#allocation3], 6144
    $region25: #{tpu_custom_call.1} parent=1 // pred_fallthru
      _
    // Predicated region
    $region26: #{tpu_custom_call.1} parent=1 // pred_check
      _
    $region27: #{tpu_custom_call.1} parent=1 // pred_check_branch
      %50 = sbr.rel (0) target = $region29
    $region28: #{tpu_custom_call.1} parent=1 // pred_region
      %52 = dma.done [#allocation6], 1024
    $region29: #{tpu_custom_call.1} parent=1 // pred_fallthru
      _
    %v54 = vld [vmem:[%s0] sm:$0xf]
    %v55 = vld [vmem:[%s0 + $0x4] sm:$0xf]
    %v56 = vld [vmem:[%s0 + $0x8] sm:$0xf]
    %v57 = vld [vmem:[%s0 + $0xc] sm:$0xf]
    %v58 = vld [vmem:[%s0 + $0x10] sm:$0xf]
    %v59 = vld [vmem:[%s0 + $0x14] sm:$0xf]
    %v60 = vld [vmem:[%s0 + $0x18] sm:$0xf]
    %v61 = vld [vmem:[%s0 + $0x1c] sm:$0xf]
    %v62 = vld [vmem:[%s1] sm:$0xf]
    %v63 = vld [vmem:[%s1 + $0x4] sm:$0xf]
    %v64 = vld [vmem:[%s4] sm:$0x1]
    %v65 = vperm.slane %v64, 0
    %v74 = vunpack.c.l.b16 %v54
    %v75 = vunpack.c.l.b16 %v55
    %v76 = vunpack.c.l.b16 %v56
    %v77 = vunpack.c.l.b16 %v57
    %v78 = vunpack.c.l.b16 %v58
    %v79 = vunpack.c.l.b16 %v59
    %v80 = vunpack.c.l.b16 %v60
    %v81 = vunpack.c.l.b16 %v61
    %v82 = vpack.c.b16 %v75, %v74
    %v83 = vpack.c.b16 %v77, %v76
    %v84 = vpack.c.b16 %v79, %v78
    %v85 = vpack.c.b16 %v81, %v80
    %v88 = vunpack.c.l.b16 %v62
    %v89 = vunpack.c.l.b16 %v63
    %v90 = vpack.c.b16 %v89, %v88
    %vm92 = vcmask 130048
    %v94 = vsel %vm92, %v82, 0
    %v97 = vsel %vm92, %v83, 0
    %v100 = vsel %vm92, %v84, 0
    %v103 = vsel %vm92, %v85, 0
    %105 = vmatpush.bf16.msra.mxu0 0
    %106 = vmatpush.bf16.msra.mxu0 0
    %107 = vmatpush.bf16.msra.mxu0 0
    %108 = vmatpush.bf16.msra.mxu0 0
    %109 = vmatpush.bf16.msra.mxu0 0
    %110 = vmatpush.bf16.msra.mxu0 0
    %111 = vmatpush.bf16.msra.mxu0 0
    %112 = vmatpush.bf16.msra.mxu0 %v90
    %113 = vmatmul.bf16.gmra.mxu0 %v94
    %v114 = vpop.f32.mrf.mxu0
    %v115 = vadd.f32 %v65, %v114
    %v116 = vpop.f32.mrf.mxu0
    %v117 = vadd.f32 %v65, %v116
    %118 = vmatmul.bf16.gmra.mxu0 %v97
    %v119 = vpop.f32.mrf.mxu0
    %v120 = vadd.f32 %v65, %v119
    %v121 = vpop.f32.mrf.mxu0
    %v122 = vadd.f32 %v65, %v121
    %123 = vmatmul.bf16.gmra.mxu0 %v100
    %v124 = vpop.f32.mrf.mxu0
    %v125 = vadd.f32 %v65, %v124
    %v126 = vpop.f32.mrf.mxu0
    %v127 = vadd.f32 %v65, %v126
    %128 = vmatmul.bf16.gmra.mxu0 %v103
    %v129 = vpop.f32.mrf.mxu0
    %v130 = vadd.f32 %v65, %v129
    %v131 = vpop.f32.mrf.mxu0
    %v132 = vadd.f32 %v65, %v131
    %133 = vdwg.mxu0
    %v134 = vmax.f32 %v115, 0.0
    %v135 = vmax.f32 %v117, 0.0
    %v136 = vmax.f32 %v120, 0.0
    %v137 = vmax.f32 %v122, 0.0
    %v138 = vmax.f32 %v125, 0.0
    %v139 = vmax.f32 %v127, 0.0
    %v140 = vmax.f32 %v130, 0.0
    %v141 = vmax.f32 %v132, 0.0
    %v142 = vpack.c.bf16 %v135, %v134
    %v143 = vpack.c.bf16 %v137, %v136
    %v144 = vpack.c.bf16 %v139, %v138
    %v145 = vpack.c.bf16 %v141, %v140
    %v146 = vld [vmem:[#allocation2] sm:$0xf]
    %v147 = vld [vmem:[#allocation2 + $0x4] sm:$0xf]
    %v148 = vld [vmem:[#allocation2 + $0x8] sm:$0xf]
    %v149 = vld [vmem:[#allocation2 + $0xc] sm:$0xf]
    %v150 = vld [vmem:[#allocation2 + $0x10] sm:$0xf]
    %v151 = vld [vmem:[#allocation2 + $0x14] sm:$0xf]
    %v152 = vld [vmem:[#allocation2 + $0x18] sm:$0xf]
    %v153 = vld [vmem:[#allocation2 + $0x1c] sm:$0xf]
    %v154 = vld [vmem:[#allocation2 + $0x20] sm:$0xf]
    %v155 = vld [vmem:[#allocation2 + $0x24] sm:$0xf]
    %v156 = vld [vmem:[#allocation2 + $0x28] sm:$0xf]
    %v157 = vld [vmem:[#allocation2 + $0x2c] sm:$0xf]
    %v158 = vld [vmem:[#allocation2 + $0x30] sm:$0xf]
    %v159 = vld [vmem:[#allocation2 + $0x34] sm:$0xf]
    %v160 = vld [vmem:[#allocation2 + $0x38] sm:$0xf]
    %v161 = vld [vmem:[#allocation2 + $0x3c] sm:$0xf]
    %v162 = vld [vmem:[%s4 + $0x1] sm:$0x1]
    %v163 = vperm.slane %v162, 0
    %v180 = vunpack.c.l.b16 %v146
    %v181 = vunpack.c.l.b16 %v147
    %v182 = vunpack.c.l.b16 %v148
    %v183 = vunpack.c.l.b16 %v149
    %v184 = vunpack.c.l.b16 %v150
    %v185 = vunpack.c.l.b16 %v151
    %v186 = vunpack.c.l.b16 %v152
    %v187 = vunpack.c.l.b16 %v153
    %v188 = vunpack.c.l.b16 %v154
    %v189 = vunpack.c.l.b16 %v155
    %v190 = vunpack.c.l.b16 %v156
    %v191 = vunpack.c.l.b16 %v157
    %v192 = vunpack.c.l.b16 %v158
    %v193 = vunpack.c.l.b16 %v159
    %v194 = vunpack.c.l.b16 %v160
    %v195 = vunpack.c.l.b16 %v161
    %v196 = vpack.c.b16 %v181, %v180
    %v197 = vpack.c.b16 %v183, %v182
    %v198 = vpack.c.b16 %v185, %v184
    %v199 = vpack.c.b16 %v187, %v186
    %v200 = vpack.c.b16 %v189, %v188
    %v201 = vpack.c.b16 %v191, %v190
    %v202 = vpack.c.b16 %v193, %v192
    %v203 = vpack.c.b16 %v195, %v194
    %212 = vmatpush.bf16.msra.mxu0 %v203
    %213 = vmatpush.bf16.msra.mxu0 %v202
    %214 = vmatpush.bf16.msra.mxu0 %v201
    %215 = vmatpush.bf16.msra.mxu0 %v200
    %216 = vmatpush.bf16.msra.mxu0 %v199
    %217 = vmatpush.bf16.msra.mxu0 %v198
    %218 = vmatpush.bf16.msra.mxu0 %v197
    %219 = vmatpush.bf16.msra.mxu0 %v196
    %220 = vmatmul.bf16.gmra.mxu0 %v142
    %v221 = vpop.f32.mrf.mxu0
    %v222 = vadd.f32 %v163, %v221
    %v223 = vpop.f32.mrf.mxu0
    %v224 = vadd.f32 %v163, %v223
    %225 = vmatmul.bf16.gmra.mxu0 %v143
    %v226 = vpop.f32.mrf.mxu0
    %v227 = vadd.f32 %v163, %v226
    %v228 = vpop.f32.mrf.mxu0
    %v229 = vadd.f32 %v163, %v228
    %230 = vmatmul.bf16.gmra.mxu0 %v144
    %v231 = vpop.f32.mrf.mxu0
    %v232 = vadd.f32 %v163, %v231
    %v233 = vpop.f32.mrf.mxu0
    %v234 = vadd.f32 %v163, %v233
    %235 = vmatmul.bf16.gmra.mxu0 %v145
    %v236 = vpop.f32.mrf.mxu0
    %v237 = vadd.f32 %v163, %v236
    %v238 = vpop.f32.mrf.mxu0
    %v239 = vadd.f32 %v163, %v238
    %240 = vdwg.mxu0
    %v241 = vmax.f32 %v222, 0.0
    %v242 = vmax.f32 %v224, 0.0
    %v243 = vmax.f32 %v227, 0.0
    %v244 = vmax.f32 %v229, 0.0
    %v245 = vmax.f32 %v232, 0.0
    %v246 = vmax.f32 %v234, 0.0
    %v247 = vmax.f32 %v237, 0.0
    %v248 = vmax.f32 %v239, 0.0
    %v249 = vpack.c.bf16 %v242, %v241
    %v250 = vpack.c.bf16 %v244, %v243
    %v251 = vpack.c.bf16 %v246, %v245
    %v252 = vpack.c.bf16 %v248, %v247
    %s253 = scalar_lea.vmem [#allocation2], 64
    %v254 = vld [vmem:[%s253] sm:$0xf]
    %v255 = vld [vmem:[%s253 + $0x4] sm:$0xf]
    %v256 = vld [vmem:[%s253 + $0x8] sm:$0xf]
    %v257 = vld [vmem:[%s253 + $0xc] sm:$0xf]
    %v258 = vld [vmem:[%s253 + $0x10] sm:$0xf]
    %v259 = vld [vmem:[%s253 + $0x14] sm:$0xf]
    %v260 = vld [vmem:[%s253 + $0x18] sm:$0xf]
    %v261 = vld [vmem:[%s253 + $0x1c] sm:$0xf]
    %v262 = vld [vmem:[%s253 + $0x20] sm:$0xf]
    %v263 = vld [vmem:[%s253 + $0x24] sm:$0xf]
    %v264 = vld [vmem:[%s253 + $0x28] sm:$0xf]
    %v265 = vld [vmem:[%s253 + $0x2c] sm:$0xf]
    %v266 = vld [vmem:[%s253 + $0x30] sm:$0xf]
    %v267 = vld [vmem:[%s253 + $0x34] sm:$0xf]
    %v268 = vld [vmem:[%s253 + $0x38] sm:$0xf]
    %v269 = vld [vmem:[%s253 + $0x3c] sm:$0xf]
    %v270 = vld [vmem:[%s4 + $0x2] sm:$0x1]
    %v271 = vperm.slane %v270, 0
    %v288 = vunpack.c.l.b16 %v254
    %v289 = vunpack.c.l.b16 %v255
    %v290 = vunpack.c.l.b16 %v256
    %v291 = vunpack.c.l.b16 %v257
    %v292 = vunpack.c.l.b16 %v258
    %v293 = vunpack.c.l.b16 %v259
    %v294 = vunpack.c.l.b16 %v260
    %v295 = vunpack.c.l.b16 %v261
    %v296 = vunpack.c.l.b16 %v262
    %v297 = vunpack.c.l.b16 %v263
    %v298 = vunpack.c.l.b16 %v264
    %v299 = vunpack.c.l.b16 %v265
    %v300 = vunpack.c.l.b16 %v266
    %v301 = vunpack.c.l.b16 %v267
    %v302 = vunpack.c.l.b16 %v268
    %v303 = vunpack.c.l.b16 %v269
    %v304 = vpack.c.b16 %v289, %v288
    %v305 = vpack.c.b16 %v291, %v290
    %v306 = vpack.c.b16 %v293, %v292
    %v307 = vpack.c.b16 %v295, %v294
    %v308 = vpack.c.b16 %v297, %v296
    %v309 = vpack.c.b16 %v299, %v298
    %v310 = vpack.c.b16 %v301, %v300
    %v311 = vpack.c.b16 %v303, %v302
    %320 = vmatpush.bf16.msra.mxu0 %v311
    %321 = vmatpush.bf16.msra.mxu0 %v310
    %322 = vmatpush.bf16.msra.mxu0 %v309
    %323 = vmatpush.bf16.msra.mxu0 %v308
    %324 = vmatpush.bf16.msra.mxu0 %v307
    %325 = vmatpush.bf16.msra.mxu0 %v306
    %326 = vmatpush.bf16.msra.mxu0 %v305
    %327 = vmatpush.bf16.msra.mxu0 %v304
    %328 = vmatmul.bf16.gmra.mxu0 %v249
    %v329 = vpop.f32.mrf.mxu0
    %v330 = vadd.f32 %v271, %v329
    %v331 = vpop.f32.mrf.mxu0
    %v332 = vadd.f32 %v271, %v331
    %333 = vmatmul.bf16.gmra.mxu0 %v250
    %v334 = vpop.f32.mrf.mxu0
    %v335 = vadd.f32 %v271, %v334
    %v336 = vpop.f32.mrf.mxu0
    %v337 = vadd.f32 %v271, %v336
    %338 = vmatmul.bf16.gmra.mxu0 %v251
    %v339 = vpop.f32.mrf.mxu0
    %v340 = vadd.f32 %v271, %v339
    %v341 = vpop.f32.mrf.mxu0
    %v342 = vadd.f32 %v271, %v341
    %343 = vmatmul.bf16.gmra.mxu0 %v252
    %v344 = vpop.f32.mrf.mxu0
    %v345 = vadd.f32 %v271, %v344
    %v346 = vpop.f32.mrf.mxu0
    %v347 = vadd.f32 %v271, %v346
    %348 = vdwg.mxu0
    %v349 = vmax.f32 %v330, 0.0
    %v350 = vmax.f32 %v332, 0.0
    %v351 = vmax.f32 %v335, 0.0
    %v352 = vmax.f32 %v337, 0.0
    %v353 = vmax.f32 %v340, 0.0
    %v354 = vmax.f32 %v342, 0.0
    %v355 = vmax.f32 %v345, 0.0
    %v356 = vmax.f32 %v347, 0.0
    %v357 = vpack.c.bf16 %v350, %v349
    %v358 = vpack.c.bf16 %v352, %v351
    %v359 = vpack.c.bf16 %v354, %v353
    %v360 = vpack.c.bf16 %v356, %v355
    %s361 = scalar_lea.vmem [#allocation2], 128
    %v362 = vld [vmem:[%s361] sm:$0xf]
    %v363 = vld [vmem:[%s361 + $0x4] sm:$0xf]
    %v364 = vld [vmem:[%s361 + $0x8] sm:$0xf]
    %v365 = vld [vmem:[%s361 + $0xc] sm:$0xf]
    %v366 = vld [vmem:[%s361 + $0x10] sm:$0xf]
    %v367 = vld [vmem:[%s361 + $0x14] sm:$0xf]
    %v368 = vld [vmem:[%s361 + $0x18] sm:$0xf]
    %v369 = vld [vmem:[%s361 + $0x1c] sm:$0xf]
    %v370 = vld [vmem:[%s361 + $0x20] sm:$0xf]
    %v371 = vld [vmem:[%s361 + $0x24] sm:$0xf]
    %v372 = vld [vmem:[%s361 + $0x28] sm:$0xf]
    %v373 = vld [vmem:[%s361 + $0x2c] sm:$0xf]
    %v374 = vld [vmem:[%s361 + $0x30] sm:$0xf]
    %v375 = vld [vmem:[%s361 + $0x34] sm:$0xf]
    %v376 = vld [vmem:[%s361 + $0x38] sm:$0xf]
    %v377 = vld [vmem:[%s361 + $0x3c] sm:$0xf]
    %v378 = vld [vmem:[%s4 + $0x3] sm:$0x1]
    %v379 = vperm.slane %v378, 0
    %v396 = vunpack.c.l.b16 %v362
    %v397 = vunpack.c.l.b16 %v363
    %v398 = vunpack.c.l.b16 %v364
    %v399 = vunpack.c.l.b16 %v365
    %v400 = vunpack.c.l.b16 %v366
    %v401 = vunpack.c.l.b16 %v367
    %v402 = vunpack.c.l.b16 %v368
    %v403 = vunpack.c.l.b16 %v369
    %v404 = vunpack.c.l.b16 %v370
    %v405 = vunpack.c.l.b16 %v371
    %v406 = vunpack.c.l.b16 %v372
    %v407 = vunpack.c.l.b16 %v373
    %v408 = vunpack.c.l.b16 %v374
    %v409 = vunpack.c.l.b16 %v375
    %v410 = vunpack.c.l.b16 %v376
    %v411 = vunpack.c.l.b16 %v377
    %v412 = vpack.c.b16 %v397, %v396
    %v413 = vpack.c.b16 %v399, %v398
    %v414 = vpack.c.b16 %v401, %v400
    %v415 = vpack.c.b16 %v403, %v402
    %v416 = vpack.c.b16 %v405, %v404
    %v417 = vpack.c.b16 %v407, %v406
    %v418 = vpack.c.b16 %v409, %v408
    %v419 = vpack.c.b16 %v411, %v410
    %428 = vmatpush.bf16.msra.mxu0 %v419
    %429 = vmatpush.bf16.msra.mxu0 %v418
    %430 = vmatpush.bf16.msra.mxu0 %v417
    %431 = vmatpush.bf16.msra.mxu0 %v416
    %432 = vmatpush.bf16.msra.mxu0 %v415
    %433 = vmatpush.bf16.msra.mxu0 %v414
    %434 = vmatpush.bf16.msra.mxu0 %v413
    %435 = vmatpush.bf16.msra.mxu0 %v412
    %436 = vmatmul.bf16.gmra.mxu0 %v357
    %v437 = vpop.f32.mrf.mxu0
    %v438 = vadd.f32 %v379, %v437
    %v439 = vpop.f32.mrf.mxu0
    %v440 = vadd.f32 %v379, %v439
    %441 = vmatmul.bf16.gmra.mxu0 %v358
    %v442 = vpop.f32.mrf.mxu0
    %v443 = vadd.f32 %v379, %v442
    %v444 = vpop.f32.mrf.mxu0
    %v445 = vadd.f32 %v379, %v444
    %446 = vmatmul.bf16.gmra.mxu0 %v359
    %v447 = vpop.f32.mrf.mxu0
    %v448 = vadd.f32 %v379, %v447
    %v449 = vpop.f32.mrf.mxu0
    %v450 = vadd.f32 %v379, %v449
    %451 = vmatmul.bf16.gmra.mxu0 %v360
    %v452 = vpop.f32.mrf.mxu0
    %v453 = vadd.f32 %v379, %v452
    %v454 = vpop.f32.mrf.mxu0
    %v455 = vadd.f32 %v379, %v454
    %456 = vdwg.mxu0
    %v457 = vrot.slane %v438, 4
    %v458 = vmax.f32 %v438, %v457
    %v459 = vrot.slane %v458, 2
    %v460 = vmax.f32 %v458, %v459
    %v461 = vrot.slane %v460, 1
    %v462 = vmax.f32 %v460, %v461
    %v463 = vrot.slane %v440, 4
    %v464 = vmax.f32 %v440, %v463
    %v465 = vrot.slane %v464, 2
    %v466 = vmax.f32 %v464, %v465
    %v467 = vrot.slane %v466, 1
    %v468 = vmax.f32 %v466, %v467
    %v469 = vrot.slane %v443, 4
    %v470 = vmax.f32 %v443, %v469
    %v471 = vrot.slane %v470, 2
    %v472 = vmax.f32 %v470, %v471
    %v473 = vrot.slane %v472, 1
    %v474 = vmax.f32 %v472, %v473
    %v475 = vrot.slane %v445, 4
    %v476 = vmax.f32 %v445, %v475
    %v477 = vrot.slane %v476, 2
    %v478 = vmax.f32 %v476, %v477
    %v479 = vrot.slane %v478, 1
    %v480 = vmax.f32 %v478, %v479
    %v481 = vrot.slane %v448, 4
    %v482 = vmax.f32 %v448, %v481
    %v483 = vrot.slane %v482, 2
    %v484 = vmax.f32 %v482, %v483
    %v485 = vrot.slane %v484, 1
    %v486 = vmax.f32 %v484, %v485
    %v487 = vrot.slane %v450, 4
    %v488 = vmax.f32 %v450, %v487
    %v489 = vrot.slane %v488, 2
    %v490 = vmax.f32 %v488, %v489
    %v491 = vrot.slane %v490, 1
    %v492 = vmax.f32 %v490, %v491
    %v493 = vrot.slane %v453, 4
    %v494 = vmax.f32 %v453, %v493
    %v495 = vrot.slane %v494, 2
    %v496 = vmax.f32 %v494, %v495
    %v497 = vrot.slane %v496, 1
    %v498 = vmax.f32 %v496, %v497
    %v499 = vrot.slane %v455, 4
    %v500 = vmax.f32 %v455, %v499
    %v501 = vrot.slane %v500, 2
    %v502 = vmax.f32 %v500, %v501
    %v503 = vrot.slane %v502, 1
    %v504 = vmax.f32 %v502, %v503
    %v505 = vpack.c.bf16 %v462, %v462
    %v506 = vpack.c.bf16 %v468, %v468
    %v507 = vpack.c.bf16 %v474, %v474
    %v508 = vpack.c.bf16 %v480, %v480
    %v509 = vpack.c.bf16 %v486, %v486
    %v510 = vpack.c.bf16 %v492, %v492
    %v511 = vpack.c.bf16 %v498, %v498
    %v512 = vpack.c.bf16 %v504, %v504
    %s513 = scalar_lea.vmem [#allocation2], 192
    %v514 = vld [vmem:[%s513] sm:$0xf]
    %v515 = vld [vmem:[%s513 + $0x4] sm:$0xf]
    %v516 = vld [vmem:[%s513 + $0x8] sm:$0xf]
    %v517 = vld [vmem:[%s513 + $0xc] sm:$0xf]
    %v518 = vld [vmem:[%s513 + $0x10] sm:$0xf]
    %v519 = vld [vmem:[%s513 + $0x14] sm:$0xf]
    %v520 = vld [vmem:[%s513 + $0x18] sm:$0xf]
    %v521 = vld [vmem:[%s513 + $0x1c] sm:$0xf]
    %v522 = vld [vmem:[%s513 + $0x20] sm:$0xf]
    %v523 = vld [vmem:[%s513 + $0x24] sm:$0xf]
    %v524 = vld [vmem:[%s513 + $0x28] sm:$0xf]
    %v525 = vld [vmem:[%s513 + $0x2c] sm:$0xf]
    %v526 = vld [vmem:[%s513 + $0x30] sm:$0xf]
    %v527 = vld [vmem:[%s513 + $0x34] sm:$0xf]
    %v528 = vld [vmem:[%s513 + $0x38] sm:$0xf]
    %v529 = vld [vmem:[%s513 + $0x3c] sm:$0xf]
    %v530 = vld [vmem:[%s4 + $0x4] sm:$0x1]
    %v531 = vperm.slane %v530, 0
    %v540 = vunpack.c.l.b16 %v505
    %v541 = vunpack.c.l.b16 %v506
    %v542 = vunpack.c.l.b16 %v507
    %v543 = vunpack.c.l.b16 %v508
    %v544 = vunpack.c.l.b16 %v509
    %v545 = vunpack.c.l.b16 %v510
    %v546 = vunpack.c.l.b16 %v511
    %v547 = vunpack.c.l.b16 %v512
    %vm548 = vcmask 1041409
    %v549 = vsel %vm548, %v541, %v540
    %vm550 = vcmask 1042434
    %v551 = vsel %vm550, %v542, %v549
    %vm552 = vcmask 1043459
    %v553 = vsel %vm552, %v543, %v551
    %vm554 = vcmask 1044484
    %v555 = vsel %vm554, %v544, %v553
    %vm556 = vcmask 1045509
    %v557 = vsel %vm556, %v545, %v555
    %vm558 = vcmask 1046534
    %v559 = vsel %vm558, %v546, %v557
    %vm560 = vcmask 1047559
    %v561 = vsel %vm560, %v547, %v559
    %v562 = vpack.c.b16 %v561, %v561
    %v580 = vunpack.c.l.b16 %v514
    %v581 = vunpack.c.l.b16 %v515
    %v582 = vunpack.c.l.b16 %v516
    %v583 = vunpack.c.l.b16 %v517
    %v584 = vunpack.c.l.b16 %v518
    %v585 = vunpack.c.l.b16 %v519
    %v586 = vunpack.c.l.b16 %v520
    %v587 = vunpack.c.l.b16 %v521
    %v588 = vunpack.c.l.b16 %v522
    %v589 = vunpack.c.l.b16 %v523
    %v590 = vunpack.c.l.b16 %v524
    %v591 = vunpack.c.l.b16 %v525
    %v592 = vunpack.c.l.b16 %v526
    %v593 = vunpack.c.l.b16 %v527
    %v594 = vunpack.c.l.b16 %v528
    %v595 = vunpack.c.l.b16 %v529
    %v596 = vpack.c.b16 %v581, %v580
    %v597 = vpack.c.b16 %v583, %v582
    %v598 = vpack.c.b16 %v585, %v584
    %v599 = vpack.c.b16 %v587, %v586
    %v600 = vpack.c.b16 %v589, %v588
    %v601 = vpack.c.b16 %v591, %v590
    %v602 = vpack.c.b16 %v593, %v592
    %v603 = vpack.c.b16 %v595, %v594
    %612 = vmatpush.bf16.msra.mxu0 %v603
    %613 = vmatpush.bf16.msra.mxu0 %v602
    %614 = vmatpush.bf16.msra.mxu0 %v601
    %615 = vmatpush.bf16.msra.mxu0 %v600
    %616 = vmatpush.bf16.msra.mxu0 %v599
    %617 = vmatpush.bf16.msra.mxu0 %v598
    %618 = vmatpush.bf16.msra.mxu0 %v597
    %619 = vmatpush.bf16.msra.mxu0 %v596
    %620 = vmatmul.bf16.gmra.mxu0 %v562
    %v621 = vpop.f32.mrf.mxu0
    %v622 = vadd.f32 %v531, %v621
    %v623 = vpop.f32.mrf.mxu0
    %624 = vdwg.mxu0
    %v625 = vmax.f32 %v622, 0.0
    %v626 = vpack.c.bf16 %v625, %v625
    %s627 = scalar_lea.vmem [#allocation2], 256
    %v628 = vld [vmem:[%s627] sm:$0xf]
    %v629 = vld [vmem:[%s627 + $0x4] sm:$0xf]
    %v630 = vld [vmem:[%s627 + $0x8] sm:$0xf]
    %v631 = vld [vmem:[%s627 + $0xc] sm:$0xf]
    %v632 = vld [vmem:[%s627 + $0x10] sm:$0xf]
    %v633 = vld [vmem:[%s627 + $0x14] sm:$0xf]
    %v634 = vld [vmem:[%s627 + $0x18] sm:$0xf]
    %v635 = vld [vmem:[%s627 + $0x1c] sm:$0xf]
    %v636 = vld [vmem:[%s627 + $0x20] sm:$0xf]
    %v637 = vld [vmem:[%s627 + $0x24] sm:$0xf]
    %v638 = vld [vmem:[%s627 + $0x28] sm:$0xf]
    %v639 = vld [vmem:[%s627 + $0x2c] sm:$0xf]
    %v640 = vld [vmem:[%s627 + $0x30] sm:$0xf]
    %v641 = vld [vmem:[%s627 + $0x34] sm:$0xf]
    %v642 = vld [vmem:[%s627 + $0x38] sm:$0xf]
    %v643 = vld [vmem:[%s627 + $0x3c] sm:$0xf]
    %v644 = vld [vmem:[%s4 + $0x5] sm:$0x1]
    %v645 = vperm.slane %v644, 0
    %v662 = vunpack.c.l.b16 %v628
    %v663 = vunpack.c.l.b16 %v629
    %v664 = vunpack.c.l.b16 %v630
    %v665 = vunpack.c.l.b16 %v631
    %v666 = vunpack.c.l.b16 %v632
    %v667 = vunpack.c.l.b16 %v633
    %v668 = vunpack.c.l.b16 %v634
    %v669 = vunpack.c.l.b16 %v635
    %v670 = vunpack.c.l.b16 %v636
    %v671 = vunpack.c.l.b16 %v637
    %v672 = vunpack.c.l.b16 %v638
    %v673 = vunpack.c.l.b16 %v639
    %v674 = vunpack.c.l.b16 %v640
    %v675 = vunpack.c.l.b16 %v641
    %v676 = vunpack.c.l.b16 %v642
    %v677 = vunpack.c.l.b16 %v643
    %v678 = vpack.c.b16 %v663, %v662
    %v679 = vpack.c.b16 %v665, %v664
    %v680 = vpack.c.b16 %v667, %v666
    %v681 = vpack.c.b16 %v669, %v668
    %v682 = vpack.c.b16 %v671, %v670
    %v683 = vpack.c.b16 %v673, %v672
    %v684 = vpack.c.b16 %v675, %v674
    %v685 = vpack.c.b16 %v677, %v676
    %694 = vmatpush.bf16.msra.mxu0 %v685
    %695 = vmatpush.bf16.msra.mxu0 %v684
    %696 = vmatpush.bf16.msra.mxu0 %v683
    %697 = vmatpush.bf16.msra.mxu0 %v682
    %698 = vmatpush.bf16.msra.mxu0 %v681
    %699 = vmatpush.bf16.msra.mxu0 %v680
    %700 = vmatpush.bf16.msra.mxu0 %v679
    %701 = vmatpush.bf16.msra.mxu0 %v678
    %702 = vmatmul.bf16.gmra.mxu0 %v626
    %v703 = vpop.f32.mrf.mxu0
    %v704 = vadd.f32 %v645, %v703
    %v705 = vpop.f32.mrf.mxu0
    %706 = vdwg.mxu0
    %v707 = vmax.f32 %v704, 0.0
    %v708 = vpack.c.bf16 %v707, %v707
    %s709 = scalar_lea.vmem [#allocation2], 320
    %v710 = vld [vmem:[%s709] sm:$0xf]
    %v711 = vld [vmem:[%s709 + $0x4] sm:$0xf]
    %v712 = vld [vmem:[%s709 + $0x8] sm:$0xf]
    %v713 = vld [vmem:[%s709 + $0xc] sm:$0xf]
    %v714 = vld [vmem:[%s709 + $0x10] sm:$0xf]
    %v715 = vld [vmem:[%s709 + $0x14] sm:$0xf]
    %v716 = vld [vmem:[%s709 + $0x18] sm:$0xf]
    %v717 = vld [vmem:[%s709 + $0x1c] sm:$0xf]
    %v718 = vld [vmem:[%s709 + $0x20] sm:$0xf]
    %v719 = vld [vmem:[%s709 + $0x24] sm:$0xf]
    %v720 = vld [vmem:[%s709 + $0x28] sm:$0xf]
    %v721 = vld [vmem:[%s709 + $0x2c] sm:$0xf]
    %v722 = vld [vmem:[%s709 + $0x30] sm:$0xf]
    %v723 = vld [vmem:[%s709 + $0x34] sm:$0xf]
    %v724 = vld [vmem:[%s709 + $0x38] sm:$0xf]
    %v725 = vld [vmem:[%s709 + $0x3c] sm:$0xf]
    %v726 = vld [vmem:[%s4 + $0x6] sm:$0x1]
    %v727 = vperm.slane %v726, 0
    %v744 = vunpack.c.l.b16 %v710
    %v745 = vunpack.c.l.b16 %v711
    %v746 = vunpack.c.l.b16 %v712
    %v747 = vunpack.c.l.b16 %v713
    %v748 = vunpack.c.l.b16 %v714
    %v749 = vunpack.c.l.b16 %v715
    %v750 = vunpack.c.l.b16 %v716
    %v751 = vunpack.c.l.b16 %v717
    %v752 = vunpack.c.l.b16 %v718
    %v753 = vunpack.c.l.b16 %v719
    %v754 = vunpack.c.l.b16 %v720
    %v755 = vunpack.c.l.b16 %v721
    %v756 = vunpack.c.l.b16 %v722
    %v757 = vunpack.c.l.b16 %v723
    %v758 = vunpack.c.l.b16 %v724
    %v759 = vunpack.c.l.b16 %v725
    %v760 = vpack.c.b16 %v745, %v744
    %v761 = vpack.c.b16 %v747, %v746
    %v762 = vpack.c.b16 %v749, %v748
    %v763 = vpack.c.b16 %v751, %v750
    %v764 = vpack.c.b16 %v753, %v752
    %v765 = vpack.c.b16 %v755, %v754
    %v766 = vpack.c.b16 %v757, %v756
    %v767 = vpack.c.b16 %v759, %v758
    %776 = vmatpush.bf16.msra.mxu0 %v767
    %777 = vmatpush.bf16.msra.mxu0 %v766
    %778 = vmatpush.bf16.msra.mxu0 %v765
    %779 = vmatpush.bf16.msra.mxu0 %v764
    %780 = vmatpush.bf16.msra.mxu0 %v763
    %781 = vmatpush.bf16.msra.mxu0 %v762
    %782 = vmatpush.bf16.msra.mxu0 %v761
    %783 = vmatpush.bf16.msra.mxu0 %v760
    %784 = vmatmul.bf16.gmra.mxu0 %v708
    %v785 = vpop.f32.mrf.mxu0
    %v786 = vadd.f32 %v727, %v785
    %v787 = vpop.f32.mrf.mxu0
    %788 = vdwg.mxu0
    %v789 = vmax.f32 %v786, 0.0
    %v790 = vpack.c.bf16 %v789, %v789
    %v791 = vld [vmem:[#allocation5] sm:$0xf]
    %v792 = vld [vmem:[#allocation5 + $0x4] sm:$0xf]
    %v793 = vld [vmem:[#allocation5 + $0x8] sm:$0xf]
    %v794 = vld [vmem:[#allocation5 + $0xc] sm:$0xf]
    %v795 = vld [vmem:[#allocation5 + $0x10] sm:$0xf]
    %v796 = vld [vmem:[#allocation5 + $0x14] sm:$0xf]
    %v797 = vld [vmem:[#allocation5 + $0x18] sm:$0xf]
    %v798 = vld [vmem:[#allocation5 + $0x1c] sm:$0xf]
    %v799 = vld [vmem:[#allocation5 + $0x20] sm:$0xf]
    %v800 = vld [vmem:[#allocation5 + $0x24] sm:$0xf]
    %v801 = vld [vmem:[#allocation5 + $0x28] sm:$0xf]
    %v802 = vld [vmem:[#allocation5 + $0x2c] sm:$0xf]
    %v803 = vld [vmem:[#allocation5 + $0x30] sm:$0xf]
    %v804 = vld [vmem:[#allocation5 + $0x34] sm:$0xf]
    %v805 = vld [vmem:[#allocation5 + $0x38] sm:$0xf]
    %v806 = vld [vmem:[#allocation5 + $0x3c] sm:$0xf]
    %v807 = vld [vmem:[%s4 + $0x7] sm:$0x1]
    %v808 = vperm.slane %v807, 0
    %v825 = vunpack.c.l.b16 %v791
    %v826 = vunpack.c.l.b16 %v792
    %v827 = vunpack.c.l.b16 %v793
    %v828 = vunpack.c.l.b16 %v794
    %v829 = vunpack.c.l.b16 %v795
    %v830 = vunpack.c.l.b16 %v796
    %v831 = vunpack.c.l.b16 %v797
    %v832 = vunpack.c.l.b16 %v798
    %v833 = vunpack.c.l.b16 %v799
    %v834 = vunpack.c.l.b16 %v800
    %v835 = vunpack.c.l.b16 %v801
    %v836 = vunpack.c.l.b16 %v802
    %v837 = vunpack.c.l.b16 %v803
    %v838 = vunpack.c.l.b16 %v804
    %v839 = vunpack.c.l.b16 %v805
    %v840 = vunpack.c.l.b16 %v806
    %v841 = vpack.c.b16 %v826, %v825
    %v842 = vpack.c.b16 %v828, %v827
    %v843 = vpack.c.b16 %v830, %v829
    %v844 = vpack.c.b16 %v832, %v831
    %v845 = vpack.c.b16 %v834, %v833
    %v846 = vpack.c.b16 %v836, %v835
    %v847 = vpack.c.b16 %v838, %v837
    %v848 = vpack.c.b16 %v840, %v839
    %857 = vmatpush.bf16.msra.mxu0 %v848
    %858 = vmatpush.bf16.msra.mxu0 %v847
    %859 = vmatpush.bf16.msra.mxu0 %v846
    %860 = vmatpush.bf16.msra.mxu0 %v845
    %861 = vmatpush.bf16.msra.mxu0 %v844
    %862 = vmatpush.bf16.msra.mxu0 %v843
    %863 = vmatpush.bf16.msra.mxu0 %v842
    %864 = vmatpush.bf16.msra.mxu0 %v841
    %865 = vmatmul.bf16.gmra.mxu0 %v790
    %v866 = vpop.f32.mrf.mxu0
    %v867 = vadd.f32 %v808, %v866
    %v868 = vpop.f32.mrf.mxu0
    %869 = vdwg.mxu0
    %870 = vst [vmem:[#allocation7] sm:$0xff] %v867
    // Predicated region
    $region30: #{tpu_custom_call.1} parent=1 // pred_check
      _
    $region31: #{tpu_custom_call.1} parent=1 // pred_check_branch
      %872 = sbr.rel (0) target = $region33
    $region32: #{tpu_custom_call.1} parent=1 // pred_region
      %874 = vsyncadd [#allocation4], 0
      %s876 = sshll.u32 [#allocation7], 4
      %s877 = int_to_ptr.vmem [resolvable:$true] %s876
      %s878 = sshll.u32 %s5, 4
      %s879 = int_to_ptr.hbm [resolvable:$true] %s878
      %881 = dma.vmem_to_hbm [thread:$0]  %s877, 128, %s879, [#allocation4]
    $region33: #{tpu_custom_call.1} parent=1 // pred_fallthru
      _
    // Predicated region
    $region34: #{tpu_custom_call.1} parent=1 // pred_check
      _
    $region35: #{tpu_custom_call.1} parent=1 // pred_check_branch
      %883 = sbr.rel (0) target = $region37
    $region36: #{tpu_custom_call.1} parent=1 // pred_region
      %885 = dma.done [#allocation4], 128
    $region37: #{tpu_custom_call.1} parent=1 // pred_fallthru
      _
    %886 = vsyncpa [#allocation3], 1
    %887 = vsyncpa [#allocation6], 1
    %888 = vsyncpa [#allocation4], 1

</llo_original>
